<compile_context>
chip_gen: v5e
topology: v5e:2x2
jax: 0.10.0
libtpu: 0.0.40
codegen_flags: <defaults>
</compile_context>

<pallas_src>
import functools

import jax
import jax.numpy as jnp
from jax.experimental import pallas as pl
from jax.experimental.pallas import tpu as pltpu


def _round_up(x, m):
    return ((x + m - 1) // m) * m


def actor_kernel(x_ref, w1_ref, b1_ref, w2_ref, b2_ref, out_ref, *, n_action):
    # hidden = ReLU(x @ W1 + b1): bf16 operands on the MXU, f32 accumulation,
    # bias-add / ReLU in f32 on the VPU (v5e-safe: no bf16 elementwise).
    x = x_ref[...]  # (TILE_B, n_state) bf16
    h = jnp.dot(x, w1_ref[...], preferred_element_type=jnp.float32) + b1_ref[...]
    h = jnp.maximum(h, 0.0)

    # logits = h @ W2 + b2 (cast hidden to bf16 only for the MXU operand).
    logits = jnp.dot(h.astype(jnp.bfloat16), w2_ref[...],
                     preferred_element_type=jnp.float32) + b2_ref[...]

    # Mask the zero-padded action lanes so they contribute nothing to the softmax.
    col = jax.lax.broadcasted_iota(jnp.int32, logits.shape, dimension=1)
    logits = jnp.where(col < n_action, logits, jnp.float32(-1e30))

    # Numerically-stable softmax over the action lanes (f32).
    m = jnp.max(logits, axis=1, keepdims=True)
    e = jnp.exp(logits - m)
    denom = jnp.sum(e, axis=1, keepdims=True)
    out_ref[...] = e * pl.reciprocal(denom, approx=True)  # EUP reciprocal, VPU mul


def actor_forward(x, w1, b1, w2, b2, *, tile_b=256):
    """Actor forward: softmax(ReLU(x @ W1 + b1) @ W2 + b2).

    x:  (B, n_state) f32
    w1: (n_state, hidden) f32   b1: (hidden,) or (1, hidden) f32
    w2: (hidden, n_action) f32  b2: (n_action,) or (1, n_action) f32
    Returns (B, n_action) f32 action probabilities.
    """
    B, n_state = x.shape
    hidden = w1.shape[1]
    n_action = w2.shape[1]
    b1 = jnp.reshape(b1, (1, hidden))
    b2 = jnp.reshape(b2, (1, n_action))

    # Lane-dense padding: hidden 100 -> 128, n_action 2 -> 128 (zero-padded columns).
    h_pad = _round_up(hidden, 128)
    a_pad = _round_up(n_action, 128)
    w1p = jnp.zeros((n_state, h_pad), jnp.bfloat16).at[:, :hidden].set(w1.astype(jnp.bfloat16))
    b1p = jnp.zeros((1, h_pad), jnp.float32).at[:, :hidden].set(b1.astype(jnp.float32))
    w2p = jnp.zeros((h_pad, a_pad), jnp.bfloat16).at[:hidden, :n_action].set(w2.astype(jnp.bfloat16))
    b2p = jnp.zeros((1, a_pad), jnp.float32).at[:, :n_action].set(b2.astype(jnp.float32))

    # Batch tiling: pad B up to a multiple of the (sublane-aligned) tile; extra rows
    # are sliced off below. Only x / out stream; weights stay resident in VMEM.
    tile = _round_up(min(tile_b, max(8, _round_up(B, 8))), 8)
    b_padded = _round_up(B, tile)
    xp = jnp.zeros((b_padded, n_state), jnp.bfloat16).at[:B].set(x.astype(jnp.bfloat16))

    grid = (b_padded // tile,)

    out = pl.pallas_call(
        functools.partial(actor_kernel, n_action=n_action),
        out_shape=jax.ShapeDtypeStruct((b_padded, a_pad), jnp.float32),
        grid_spec=pltpu.PrefetchScalarGridSpec(
            num_scalar_prefetch=0,
            grid=grid,
            in_specs=[
                pl.BlockSpec((tile, n_state), lambda i: (i, 0)),    # x streams per tile
                pl.BlockSpec((n_state, h_pad), lambda i: (0, 0)),   # W1 resident
                pl.BlockSpec((1, h_pad), lambda i: (0, 0)),         # b1 resident
                pl.BlockSpec((h_pad, a_pad), lambda i: (0, 0)),     # W2 resident
                pl.BlockSpec((1, a_pad), lambda i: (0, 0)),         # b2 resident
            ],
            out_specs=pl.BlockSpec((tile, a_pad), lambda i: (i, 0)),
        ),
        compiler_params=pltpu.CompilerParams(
            dimension_semantics=("parallel",),  # shard batch tiles across TCs (v7x)
        ),
    )(xp, w1p, b1p, w2p, b2p)

    return out[:B, :n_action]


def init_actor_params(key, n_state, n_action, hidden=100):
    """PyTorch-Linear-like uniform init; weights stored as (in_features, out_features)."""
    k1, k2, k3, k4 = jax.random.split(key, 4)
    bound1 = 1.0 / jnp.sqrt(n_state)
    w1 = jax.random.uniform(k1, (n_state, hidden), jnp.float32, -bound1, bound1)
    b1 = jax.random.uniform(k2, (hidden,), jnp.float32, -bound1, bound1)
    bound2 = 1.0 / jnp.sqrt(hidden)
    w2 = jax.random.uniform(k3, (hidden, n_action), jnp.float32, -bound2, bound2)
    b2 = jax.random.uniform(k4, (n_action,), jnp.float32, -bound2, bound2)
    return w1, b1, w2, b2


def _reference(x, w1, b1, w2, b2, match_bf16=True):
    """Plain-JAX reference. match_bf16=True replicates the bf16-operand/f32-acc path."""
    if match_bf16:
        h = jnp.dot(x.astype(jnp.bfloat16), w1.astype(jnp.bfloat16),
                    preferred_element_type=jnp.float32) + b1[None, :]
        h = jnp.maximum(h, 0.0)
        logits = jnp.dot(h.astype(jnp.bfloat16), w2.astype(jnp.bfloat16),
                         preferred_element_type=jnp.float32) + b2[None, :]
    else:
        h = jnp.maximum(x @ w1 + b1[None, :], 0.0)
        logits = h @ w2 + b2[None, :]
    return jax.nn.softmax(logits, axis=1)


if __name__ == "__main__":
    # CartPole-ish shapes: n_state=4, n_action=2, hidden=100.
    n_state, n_action, hidden = 4, 2, 100
    key = jax.random.PRNGKey(0)
    kx, kx2, kp = jax.random.split(key, 3)
    w1, b1, w2, b2 = init_actor_params(kp, n_state, n_action, hidden)

    # Small batch (single grid step).
    B = 8
    x = jax.random.normal(kx, (B, n_state), jnp.float32)
    out = jax.block_until_ready(actor_forward(x, w1, b1, w2, b2))
    ref_bf16 = _reference(x, w1, b1, w2, b2, match_bf16=True)
    ref_f32 = _reference(x, w1, b1, w2, b2, match_bf16=False)
    assert out.shape == (B, n_action)
    assert jnp.allclose(out, ref_bf16, atol=5e-3, rtol=5e-3)
    assert jnp.allclose(out, ref_f32, atol=2e-2, rtol=2e-2)
    assert jnp.allclose(jnp.sum(out, axis=1), 1.0, atol=5e-3)

    # Larger batch exercising the tiled grid path (tile=256, row padding + slicing).
    B2 = 1000
    x2 = jax.random.normal(kx2, (B2, n_state), jnp.float32)
    out2 = jax.block_until_ready(actor_forward(x2, w1, b1, w2, b2))
    ref2 = _reference(x2, w1, b1, w2, b2, match_bf16=True)
    assert out2.shape == (B2, n_action)
    assert jnp.allclose(out2, ref2, atol=5e-3, rtol=5e-3)
    assert jnp.allclose(jnp.sum(out2, axis=1), 1.0, atol=5e-3)

    print("KERNEL_OK")
</pallas_src>

<mosaic_0001>
module attributes {stable_mosaic.version = 11 : i64} {
  func.func @actor_kernel(%arg0: i32, %arg1: memref<8x4xbf16, #tpu.memory_space<vmem>>, %arg2: memref<4x128xbf16, #tpu.memory_space<vmem>>, %arg3: memref<1x128xf32, #tpu.memory_space<vmem>>, %arg4: memref<128x128xbf16, #tpu.memory_space<vmem>>, %arg5: memref<1x128xf32, #tpu.memory_space<vmem>>, %arg6: memref<8x128xf32, #tpu.memory_space<vmem>>) attributes {dimension_semantics = [#tpu.dimension_semantics<parallel>], iteration_bounds = array<i64: 1>, scalar_prefetch = 0 : i64, scratch_operands = 0 : i64, tpu.core_type = #tpu.core_type<tc>, window_params = [{transform_indices = @transform_0, window_bounds = array<i64: 8, 4>}, {pipeline_mode = #tpu.pipeline_mode<synchronous>, transform_indices = @transform_1, window_bounds = array<i64: 4, 128>}, {pipeline_mode = #tpu.pipeline_mode<synchronous>, transform_indices = @transform_2, window_bounds = array<i64: 1, 128>}, {pipeline_mode = #tpu.pipeline_mode<synchronous>, transform_indices = @transform_3, window_bounds = array<i64: 128, 128>}, {pipeline_mode = #tpu.pipeline_mode<synchronous>, transform_indices = @transform_4, window_bounds = array<i64: 1, 128>}, {transform_indices = @transform_5, window_bounds = array<i64: 8, 128>}]} {
    %c0 = arith.constant 0 : index
    %c0_0 = arith.constant 0 : index
    %0 = vector.load %arg1[%c0, %c0_0] : memref<8x4xbf16, #tpu.memory_space<vmem>>, vector<8x4xbf16>
    %c0_1 = arith.constant 0 : index
    %c0_2 = arith.constant 0 : index
    %1 = vector.load %arg2[%c0_1, %c0_2] : memref<4x128xbf16, #tpu.memory_space<vmem>>, vector<4x128xbf16>
    %cst = arith.constant dense<0.000000e+00> : vector<8x128xf32>
    %2 = tpu.matmul %0, %1, %cst {dimension_numbers = #tpu.dot_dimension_numbers<[1], [0], [0], [1], [0, 0, 1, 1], [], []>} : vector<8x4xbf16>, vector<4x128xbf16>, vector<8x128xf32> -> vector<8x128xf32>
    %c0_3 = arith.constant 0 : index
    %c0_4 = arith.constant 0 : index
    %3 = vector.load %arg3[%c0_3, %c0_4] : memref<1x128xf32, #tpu.memory_space<vmem>>, vector<1x128xf32>
    %4 = vector.broadcast %3 : vector<1x128xf32> to vector<8x128xf32>
    %5 = arith.addf %2, %4 : vector<8x128xf32>
    %cst_5 = arith.constant 0.000000e+00 : f32
    %6 = vector.broadcast %cst_5 : f32 to vector<8x128xf32>
    %7 = arith.maximumf %5, %6 : vector<8x128xf32>
    %8 = arith.truncf %7 : vector<8x128xf32> to vector<8x128xbf16>
    %c0_6 = arith.constant 0 : index
    %c0_7 = arith.constant 0 : index
    %9 = vector.load %arg4[%c0_6, %c0_7] : memref<128x128xbf16, #tpu.memory_space<vmem>>, vector<128x128xbf16>
    %cst_8 = arith.constant dense<0.000000e+00> : vector<8x128xf32>
    %10 = tpu.matmul %8, %9, %cst_8 {dimension_numbers = #tpu.dot_dimension_numbers<[1], [0], [0], [1], [0, 0, 1, 1], [], []>} : vector<8x128xbf16>, vector<128x128xbf16>, vector<8x128xf32> -> vector<8x128xf32>
    %c0_9 = arith.constant 0 : index
    %c0_10 = arith.constant 0 : index
    %11 = vector.load %arg5[%c0_9, %c0_10] : memref<1x128xf32, #tpu.memory_space<vmem>>, vector<1x128xf32>
    %12 = vector.broadcast %11 : vector<1x128xf32> to vector<8x128xf32>
    %13 = arith.addf %10, %12 : vector<8x128xf32>
    %14 = tpu.iota {dimensions = array<i32: 1>} : vector<8x128xi32>
    %c2_i32 = arith.constant 2 : i32
    %15 = vector.broadcast %c2_i32 : i32 to vector<8x128xi32>
    %16 = arith.cmpi slt, %14, %15 : vector<8x128xi32>
    %cst_11 = arith.constant -1.000000e+30 : f32
    %17 = vector.broadcast %cst_11 : f32 to vector<8x128xf32>
    %18 = arith.select %16, %13, %17 : vector<8x128xi1>, vector<8x128xf32>
    %cst_12 = arith.constant dense<0xFF800000> : vector<8xf32>
    %19 = vector.multi_reduction <maximumf>, %18, %cst_12 [1] : vector<8x128xf32> to vector<8xf32>
    %20 = vector.shape_cast %19 : vector<8xf32> to vector<8x1xf32>
    %21 = vector.broadcast %20 : vector<8x1xf32> to vector<8x128xf32>
    %22 = arith.subf %18, %21 : vector<8x128xf32>
    %23 = math.exp %22 : vector<8x128xf32>
    %cst_13 = arith.constant dense<0.000000e+00> : vector<8xf32>
    %24 = vector.multi_reduction <add>, %23, %cst_13 [1] : vector<8x128xf32> to vector<8xf32>
    %25 = vector.shape_cast %24 : vector<8xf32> to vector<8x1xf32>
    %26 = tpu.reciprocal %25 {approx = true} : vector<8x1xf32> -> vector<8x1xf32>
    %27 = vector.broadcast %26 : vector<8x1xf32> to vector<8x128xf32>
    %28 = arith.mulf %23, %27 : vector<8x128xf32>
    %c0_14 = arith.constant 0 : index
    %c0_15 = arith.constant 0 : index
    %29 = vector.load %arg6[%c0_14, %c0_15] : memref<8x128xf32, #tpu.memory_space<vmem>>, vector<8x128xf32>
    tpu.vector_store %arg6[%c0_14, %c0_15], %28 {strides = array<i32>} : memref<8x128xf32, #tpu.memory_space<vmem>>, vector<8x128xf32>,
    return
  }
  func.func @transform_0(%arg0: i32) -> (i32, i32) {
    %c0_i32 = arith.constant 0 : i32
    %c0_i32_0 = arith.constant 0 : i32
    return %arg0, %c0_i32 : i32, i32
  }
  func.func @transform_1(%arg0: i32) -> (i32, i32) {
    %c0_i32 = arith.constant 0 : i32
    %c0_i32_0 = arith.constant 0 : i32
    %c0_i32_1 = arith.constant 0 : i32
    return %c0_i32, %c0_i32_0 : i32, i32
  }
  func.func @transform_2(%arg0: i32) -> (i32, i32) {
    %c0_i32 = arith.constant 0 : i32
    %c0_i32_0 = arith.constant 0 : i32
    %c0_i32_1 = arith.constant 0 : i32
    return %c0_i32, %c0_i32_0 : i32, i32
  }
  func.func @transform_3(%arg0: i32) -> (i32, i32) {
    %c0_i32 = arith.constant 0 : i32
    %c0_i32_0 = arith.constant 0 : i32
    %c0_i32_1 = arith.constant 0 : i32
    return %c0_i32, %c0_i32_0 : i32, i32
  }
  func.func @transform_4(%arg0: i32) -> (i32, i32) {
    %c0_i32 = arith.constant 0 : i32
    %c0_i32_0 = arith.constant 0 : i32
    %c0_i32_1 = arith.constant 0 : i32
    return %c0_i32, %c0_i32_0 : i32, i32
  }
  func.func @transform_5(%arg0: i32) -> (i32, i32) {
    %c0_i32 = arith.constant 0 : i32
    %c0_i32_0 = arith.constant 0 : i32
    return %arg0, %c0_i32 : i32, i32
  }
}

</mosaic_0001>

<llo_original>
// kernel: tpu_custom_call.1
$region0: #{tpu_custom_call.1}
  #allocation0 [shape = 'u32[]', space=smem, size = 0x4, offset = 0x4, fixed_abs, tag = 'smem constant byte address 0x4 - core index']
  #allocation1 [shape = 'u32[72,128]{1,0:T(1,128)}', space=vmem, size = 0x9000, scoped, tag = 'internal scratch']
  %s0 = inlined_call_operand.vmem [shape: bf16[8,4], index: 0, kind: input, shape index: {}]
  %s1 = inlined_call_operand.vmem [shape: bf16[4,128], index: 1, kind: input, shape index: {}]
  %s2 = inlined_call_operand.vmem [shape: f32[1,128], index: 2, kind: input, shape index: {}]
  %s3 = inlined_call_operand.hbm [shape: bf16[128,128], index: 3, kind: input, shape index: {}]
  %s4 = inlined_call_operand.vmem [shape: f32[1,128], index: 4, kind: input, shape index: {}]
  %s5 = inlined_call_operand.hbm [shape: f32[8,128], index: 5, kind: output, shape index: {}]
  %s6 = sld [smem:[#allocation0]]
  $region34: #{tpu_custom_call.1} parent=0
    _
  %s8 = ssub.s32 1, %s6
  %s9 = scalar_select 0, %s8, %s6
  $region1: #{tpu_custom_call.1} parent=0
    #allocation2 [shape = 'u8[32768]{0}', space=vmem, size = 0x8000, scoped, tag = 'input window, operand 3, single buffered']
    #allocation3 [shape = 's32[1]{0}', space=sflag, size = 0x4, scoped, tag = 'scoped memory for tpu_custom_call.1']
    #allocation4 [shape = 's32[1]{0}', space=sflag, size = 0x4, scoped, tag = 'scoped memory for tpu_custom_call.1']
    #allocation5 [shape = 'u8[4096]{0}', space=vmem, size = 0x1000, scoped, tag = 'output window, operand 0, single buffered']
    %10 = vsyncpa [#allocation3], 0
    %11 = vsyncpa [#allocation4], 0
    // Predicated region
    $region2: #{tpu_custom_call.1} parent=1 // pred_check
      _
    $region3: #{tpu_custom_call.1} parent=1 // pred_check_branch
      %13 = sbr.rel (0) target = $region5
    $region4: #{tpu_custom_call.1} parent=1 // pred_region
      _
    $region5: #{tpu_custom_call.1} parent=1 // pred_fallthru
      _
    // Predicated region
    $region6: #{tpu_custom_call.1} parent=1 // pred_check
      _
    $region7: #{tpu_custom_call.1} parent=1 // pred_check_branch
      %15 = sbr.rel (0) target = $region9
    $region8: #{tpu_custom_call.1} parent=1 // pred_region
      _
    $region9: #{tpu_custom_call.1} parent=1 // pred_fallthru
      _
    // Predicated region
    $region10: #{tpu_custom_call.1} parent=1 // pred_check
      _
    $region11: #{tpu_custom_call.1} parent=1 // pred_check_branch
      %17 = sbr.rel (0) target = $region13
    $region12: #{tpu_custom_call.1} parent=1 // pred_region
      _
    $region13: #{tpu_custom_call.1} parent=1 // pred_fallthru
      _
    // Predicated region
    $region14: #{tpu_custom_call.1} parent=1 // pred_check
      _
    $region15: #{tpu_custom_call.1} parent=1 // pred_check_branch
      %19 = sbr.rel (0) target = $region17
    $region16: #{tpu_custom_call.1} parent=1 // pred_region
      %21 = vsyncadd [#allocation3], 0
      %s22 = sshll.u32 %s3, 4
      %s23 = int_to_ptr.hbm [resolvable:$true] %s22
      %s24 = sshll.u32 [#allocation2], 4
      %s25 = int_to_ptr.vmem [resolvable:$true] %s24
      %30 = dma.hbm_to_vmem [thread:$0]  %s23, 1024, %s25, [#allocation3], 64, 64, 4
    $region17: #{tpu_custom_call.1} parent=1 // pred_fallthru
      _
    // Predicated region
    $region18: #{tpu_custom_call.1} parent=1 // pred_check
      _
    $region19: #{tpu_custom_call.1} parent=1 // pred_check_branch
      %32 = sbr.rel (0) target = $region21
    $region20: #{tpu_custom_call.1} parent=1 // pred_region
      _
    $region21: #{tpu_custom_call.1} parent=1 // pred_fallthru
      _
    // Predicated region
    $region22: #{tpu_custom_call.1} parent=1 // pred_check
      _
    $region23: #{tpu_custom_call.1} parent=1 // pred_check_branch
      %34 = sbr.rel (0) target = $region25
    $region24: #{tpu_custom_call.1} parent=1 // pred_region
      %36 = dma.done [#allocation3], 1024
    $region25: #{tpu_custom_call.1} parent=1 // pred_fallthru
      _
    %v38 = vld [vmem:[%s0] sm:$0xf]
    %v39 = vld [vmem:[%s1] sm:$0x3]
    %v40 = vld [vmem:[%s2] sm:$0x1]
    %v42 = vperm.slane %v40, 0
    %vm44 = vcmask 31744
    %v46 = vsel %vm44, %v38, 0
    %vm48 = vcmask 1041408
    %v50 = vsel %vm48, %v39, 0
    %52 = vmatpush.bf16.msra.mxu0 0
    %53 = vmatpush.bf16.msra.mxu0 0
    %54 = vmatpush.bf16.msra.mxu0 0
    %55 = vmatpush.bf16.msra.mxu0 0
    %56 = vmatpush.bf16.msra.mxu0 0
    %57 = vmatpush.bf16.msra.mxu0 0
    %58 = vmatpush.bf16.msra.mxu0 0
    %59 = vmatpush.bf16.msra.mxu0 %v50
    %60 = vmatmul.bf16.gmra.mxu0 %v46
    %v61 = vpop.f32.mrf.mxu0
    %v62 = vadd.f32 %v42, %v61
    %v63 = vpop.f32.mrf.mxu0
    %64 = vdwg.mxu0
    %v65 = vmax.f32 %v62, 0.0
    %v66 = vpack.c.bf16 %v65, %v65
    %v67 = vld [vmem:[#allocation2] sm:$0xf]
    %v68 = vld [vmem:[#allocation2 + $0x4] sm:$0xf]
    %v69 = vld [vmem:[#allocation2 + $0x8] sm:$0xf]
    %v70 = vld [vmem:[#allocation2 + $0xc] sm:$0xf]
    %v71 = vld [vmem:[#allocation2 + $0x10] sm:$0xf]
    %v72 = vld [vmem:[#allocation2 + $0x14] sm:$0xf]
    %v73 = vld [vmem:[#allocation2 + $0x18] sm:$0xf]
    %v74 = vld [vmem:[#allocation2 + $0x1c] sm:$0xf]
    %v75 = vld [vmem:[#allocation2 + $0x20] sm:$0xf]
    %v76 = vld [vmem:[#allocation2 + $0x24] sm:$0xf]
    %v77 = vld [vmem:[#allocation2 + $0x28] sm:$0xf]
    %v78 = vld [vmem:[#allocation2 + $0x2c] sm:$0xf]
    %v79 = vld [vmem:[#allocation2 + $0x30] sm:$0xf]
    %v80 = vld [vmem:[#allocation2 + $0x34] sm:$0xf]
    %v81 = vld [vmem:[#allocation2 + $0x38] sm:$0xf]
    %v82 = vld [vmem:[#allocation2 + $0x3c] sm:$0xf]
    %v83 = vld [vmem:[%s4] sm:$0x1]
    %v85 = vperm.slane %v83, 0
    %v103 = vunpack.c.l.b16 %v67
    %v104 = vunpack.c.l.b16 %v68
    %v105 = vunpack.c.l.b16 %v69
    %v106 = vunpack.c.l.b16 %v70
    %v107 = vunpack.c.l.b16 %v71
    %v108 = vunpack.c.l.b16 %v72
    %v109 = vunpack.c.l.b16 %v73
    %v110 = vunpack.c.l.b16 %v74
    %v111 = vunpack.c.l.b16 %v75
    %v112 = vunpack.c.l.b16 %v76
    %v113 = vunpack.c.l.b16 %v77
    %v114 = vunpack.c.l.b16 %v78
    %v115 = vunpack.c.l.b16 %v79
    %v116 = vunpack.c.l.b16 %v80
    %v117 = vunpack.c.l.b16 %v81
    %v118 = vunpack.c.l.b16 %v82
    %v119 = vpack.c.b16 %v104, %v103
    %v120 = vpack.c.b16 %v106, %v105
    %v121 = vpack.c.b16 %v108, %v107
    %v122 = vpack.c.b16 %v110, %v109
    %v123 = vpack.c.b16 %v112, %v111
    %v124 = vpack.c.b16 %v114, %v113
    %v125 = vpack.c.b16 %v116, %v115
    %v126 = vpack.c.b16 %v118, %v117
    %135 = vmatpush.bf16.msra.mxu0 %v126
    %136 = vmatpush.bf16.msra.mxu0 %v125
    %137 = vmatpush.bf16.msra.mxu0 %v124
    %138 = vmatpush.bf16.msra.mxu0 %v123
    %139 = vmatpush.bf16.msra.mxu0 %v122
    %140 = vmatpush.bf16.msra.mxu0 %v121
    %141 = vmatpush.bf16.msra.mxu0 %v120
    %142 = vmatpush.bf16.msra.mxu0 %v119
    %143 = vmatmul.bf16.gmra.mxu0 %v66
    %v144 = vpop.f32.mrf.mxu0
    %v145 = vadd.f32 %v85, %v144
    %v146 = vpop.f32.mrf.mxu0
    %147 = vdwg.mxu0
    %v148 = vlaneseq
    %v149 = vand.u32 %v148, 127
    %vm150 = vcmp.lt.s32.totalorder %v149, 2
    %v151 = vsel %vm150, %v145, -1e+30
    %152 = vmax.xlane.f32.xlu0 %v151
    %v153 = vpop.xlane.xlu0 %152
    %v154 = vsub.f32 %v151, %v153
    %v155 = vmul.f32 %v154, 1.442695
    %v156 = vpow.pop %v155
    %157 = vadd.xlane.f32.xlu0 %v156
    %v158 = vpop.xlane.xlu0 %157
    %v159 = vrcp.pop %v158
    %v160 = vmul.f32 %v156, %v159
    %161 = vst [vmem:[#allocation5] sm:$0xff] %v160
    // Predicated region
    $region26: #{tpu_custom_call.1} parent=1 // pred_check
      _
    $region27: #{tpu_custom_call.1} parent=1 // pred_check_branch
      %163 = sbr.rel (0) target = $region29
    $region28: #{tpu_custom_call.1} parent=1 // pred_region
      %165 = vsyncadd [#allocation4], 0
      %s167 = sshll.u32 [#allocation5], 4
      %s168 = int_to_ptr.vmem [resolvable:$true] %s167
      %s169 = sshll.u32 %s5, 4
      %s170 = int_to_ptr.hbm [resolvable:$true] %s169
      %172 = dma.vmem_to_hbm [thread:$0]  %s168, 128, %s170, [#allocation4]
    $region29: #{tpu_custom_call.1} parent=1 // pred_fallthru
      _
    // Predicated region
    $region30: #{tpu_custom_call.1} parent=1 // pred_check
      _
    $region31: #{tpu_custom_call.1} parent=1 // pred_check_branch
      %174 = sbr.rel (0) target = $region33
    $region32: #{tpu_custom_call.1} parent=1 // pred_region
      %176 = dma.done [#allocation4], 128
    $region33: #{tpu_custom_call.1} parent=1 // pred_fallthru
      _
    %177 = vsyncpa [#allocation3], 1
    %178 = vsyncpa [#allocation4], 1

</llo_original>
